<compile_context>
chip_gen: v5e
topology: v5e:2x2
jax: 0.10.0
libtpu: 0.0.40
codegen_flags: <defaults>
</compile_context>

<pallas_src>
import jax
import jax.numpy as jnp
from jax.experimental import pallas as pl
from jax.experimental.pallas import tpu as pltpu

LANE = 128


def _round_up(n, m):
    return ((n + m - 1) // m) * m


def _gcn2_kernel(x_ref, adj_ref, w1_ref, b1_ref, w2_ref, b2_ref, out_ref):
    bf16 = jnp.bfloat16
    f32 = jnp.float32

    adj = adj_ref[...]                       # [N, N]  bf16
    x = x_ref[...]                           # [N, F]  bf16

    def gc_layer(h_bf16, w_ref, b_ref):
        w = w_ref[...]                       # [fin, fout] bf16
        fin, fout = w.shape
        if fin <= fout:
            # (adj @ h) @ W — N x N contraction runs against the narrower dim.
            ah = jnp.dot(adj, h_bf16, preferred_element_type=f32)
            out = jnp.dot(ah.astype(bf16), w, preferred_element_type=f32)
        else:
            # adj @ (h @ W)
            hw = jnp.dot(h_bf16, w, preferred_element_type=f32)
            out = jnp.dot(adj, hw.astype(bf16), preferred_element_type=f32)
        # f32 bias add rides in otherwise-idle VALU slots under the MXU work.
        return out + b_ref[...]

    h = jnp.maximum(gc_layer(x, w1_ref, b1_ref), 0.0)        # f32 [N, nhid]

    # TODO(synk): dropout is an eval-mode identity (training=False); training
    # parity would mask h here via pltpu.prng_seed + pltpu.prng_random_bits.

    logits = gc_layer(h.astype(bf16), w2_ref, b2_ref)        # f32 [N, C_pad]

    # log_softmax over the class axis. Padded classes carry a -1e30 bias, so
    # they never win the max and contribute exp(.) == 0 to the sum.
    m = jnp.max(logits, axis=1, keepdims=True)
    shifted = logits - m
    lse = jnp.log(jnp.sum(jnp.exp(shifted), axis=1, keepdims=True))
    out_ref[...] = shifted - lse


def _pad_classifier(w2, b2, c_pad):
    """Zero-pad W2 columns; fill padded bias columns with -1e30 (lane-dense out)."""
    nclass = w2.shape[1]
    w2p = jnp.zeros((w2.shape[0], c_pad), jnp.bfloat16).at[:, :nclass].set(
        w2.astype(jnp.bfloat16))
    b2p = jnp.full((1, c_pad), -1e30, jnp.float32).at[:, :nclass].set(
        b2.astype(jnp.float32))
    return w2p, b2p


@jax.jit
def gcn_forward(x, adj, params):
    (w1, b1), (w2, b2) = params
    n, nfeat = x.shape
    nhid = w1.shape[1]
    nclass = w2.shape[1]
    c_pad = _round_up(max(nclass, LANE), LANE)   # lane-dense class dim

    x_bf = x.astype(jnp.bfloat16)                # halves x DMA bytes
    adj_bf = adj.astype(jnp.bfloat16)            # halves adj DMA bytes
    w1_bf = w1.astype(jnp.bfloat16)
    w2p, b2p = _pad_classifier(w2, b2, c_pad)

    # flops: per layer 2*N*N*min(fin,fout) (adj matmul) + 2*N*fin*fout (weight matmul)
    flops = (2 * n * n * min(nfeat, nhid) + 2 * n * nfeat * nhid
             + 2 * n * n * min(nhid, c_pad) + 2 * n * nhid * c_pad)
    transcendentals = n * (c_pad + 1)            # exp per padded logit + log per row
    bytes_accessed = (x_bf.size * 2 + adj_bf.size * 2 + w1_bf.size * 2
                      + b1.size * 4 + w2p.size * 2 + b2p.size * 4 + n * c_pad * 4)

    out_padded = pl.pallas_call(
        _gcn2_kernel,
        out_shape=jax.ShapeDtypeStruct((n, c_pad), jnp.float32),
        # No grid: each operand is a single full-array VMEM block at these sizes.
        in_specs=[pl.BlockSpec(memory_space=pltpu.MemorySpace.VMEM)] * 6,
        out_specs=pl.BlockSpec(memory_space=pltpu.MemorySpace.VMEM),
        cost_estimate=pl.CostEstimate(flops=flops,
                                      transcendentals=transcendentals,
                                      bytes_accessed=bytes_accessed),
    )(x_bf, adj_bf, w1_bf, b1, w2p, b2p)
    return out_padded[:, :nclass]


@jax.jit
def gcn_reference(x, adj, params):
    """Pure-JAX reference mirroring the kernel math (same bf16 casts / assoc order)."""
    (w1, b1), (w2, b2) = params
    bf16 = jnp.bfloat16
    f32 = jnp.float32
    nclass = w2.shape[1]
    c_pad = _round_up(max(nclass, LANE), LANE)
    adj_b = adj.astype(bf16)
    w2p, b2p = _pad_classifier(w2, b2, c_pad)

    def gc(h, w_bf, b):
        fin, fout = w_bf.shape
        if fin <= fout:
            ah = jnp.dot(adj_b, h.astype(bf16), preferred_element_type=f32)
            out = jnp.dot(ah.astype(bf16), w_bf, preferred_element_type=f32)
        else:
            hw = jnp.dot(h.astype(bf16), w_bf, preferred_element_type=f32)
            out = jnp.dot(adj_b, hw.astype(bf16), preferred_element_type=f32)
        return out + b

    h = jnp.maximum(gc(x, w1.astype(bf16), b1), 0.0)
    logits = gc(h, w2p, b2p)
    return jax.nn.log_softmax(logits, axis=1)[:, :nclass]


def init_gc_params(key, in_features, out_features):
    """Matches GraphConvolution.reset_parameters: U(-stdv, stdv), stdv=1/sqrt(out)."""
    stdv = 1.0 / (out_features ** 0.5)
    kw, kb = jax.random.split(key)
    w = jax.random.uniform(kw, (in_features, out_features), jnp.float32,
                           minval=-stdv, maxval=stdv)
    b = jax.random.uniform(kb, (1, out_features), jnp.float32,
                           minval=-stdv, maxval=stdv)
    return w, b


if __name__ == "__main__":
    key = jax.random.PRNGKey(0)

    # Small, forward-consistent shapes (GCN(nfeat, nhid, nclass, dropout)).
    n_nodes, nfeat, nhid, nclass = 64, 16, 32, 8

    k_x, k_adj, k1, k2 = jax.random.split(key, 4)

    x = jax.random.normal(k_x, (n_nodes, nfeat), jnp.float32)

    # Symmetric row-normalized adjacency with self-loops (typical GCN input).
    a = (jax.random.uniform(k_adj, (n_nodes, n_nodes)) < 0.1).astype(jnp.float32)
    a = jnp.maximum(a, a.T) + jnp.eye(n_nodes, dtype=jnp.float32)
    adj = a / jnp.sum(a, axis=1, keepdims=True)

    params = (
        init_gc_params(k1, nfeat, nhid),
        init_gc_params(k2, nhid, nclass),
    )

    out = gcn_forward(x, adj, params)
    jax.block_until_ready(out)

    assert out.shape == (n_nodes, nclass)
    # rows of log_softmax must exponentiate-sum to 1 over the real classes
    assert jnp.allclose(jnp.sum(jnp.exp(out), axis=1), 1.0, atol=1e-4)
    # kernel matches the math-identical pure-JAX reference
    ref = gcn_reference(x, adj, params)
    assert jnp.allclose(out, ref, atol=1e-2, rtol=1e-2)

    print("KERNEL_OK")
</pallas_src>

<mosaic_0001>
module attributes {stable_mosaic.version = 11 : i64} {
  func.func @_gcn2_kernel(%arg0: memref<64x16xbf16, #tpu.memory_space<vmem>>, %arg1: memref<64x64xbf16, #tpu.memory_space<vmem>>, %arg2: memref<16x32xbf16, #tpu.memory_space<vmem>>, %arg3: memref<1x32xf32, #tpu.memory_space<vmem>>, %arg4: memref<32x128xbf16, #tpu.memory_space<vmem>>, %arg5: memref<1x128xf32, #tpu.memory_space<vmem>>, %arg6: memref<64x128xf32, #tpu.memory_space<vmem>>) attributes {dimension_semantics = [], scalar_prefetch = 0 : i64, scratch_operands = 0 : i64, tpu.core_type = #tpu.core_type<tc>} {
    %c0 = arith.constant 0 : index
    %c0_0 = arith.constant 0 : index
    %0 = vector.load %arg1[%c0, %c0_0] : memref<64x64xbf16, #tpu.memory_space<vmem>>, vector<64x64xbf16>
    %c0_1 = arith.constant 0 : index
    %c0_2 = arith.constant 0 : index
    %1 = vector.load %arg0[%c0_1, %c0_2] : memref<64x16xbf16, #tpu.memory_space<vmem>>, vector<64x16xbf16>
    %c0_3 = arith.constant 0 : index
    %c0_4 = arith.constant 0 : index
    %2 = vector.load %arg2[%c0_3, %c0_4] : memref<16x32xbf16, #tpu.memory_space<vmem>>, vector<16x32xbf16>
    %cst = arith.constant dense<0.000000e+00> : vector<64x16xf32>
    %3 = tpu.matmul %0, %1, %cst {dimension_numbers = #tpu.dot_dimension_numbers<[1], [0], [0], [1], [0, 0, 1, 1], [], []>} : vector<64x64xbf16>, vector<64x16xbf16>, vector<64x16xf32> -> vector<64x16xf32>
    %4 = arith.truncf %3 : vector<64x16xf32> to vector<64x16xbf16>
    %cst_5 = arith.constant dense<0.000000e+00> : vector<64x32xf32>
    %5 = tpu.matmul %4, %2, %cst_5 {dimension_numbers = #tpu.dot_dimension_numbers<[1], [0], [0], [1], [0, 0, 1, 1], [], []>} : vector<64x16xbf16>, vector<16x32xbf16>, vector<64x32xf32> -> vector<64x32xf32>
    %c0_6 = arith.constant 0 : index
    %c0_7 = arith.constant 0 : index
    %6 = vector.load %arg3[%c0_6, %c0_7] : memref<1x32xf32, #tpu.memory_space<vmem>>, vector<1x32xf32>
    %7 = vector.broadcast %6 : vector<1x32xf32> to vector<64x32xf32>
    %8 = arith.addf %5, %7 : vector<64x32xf32>
    %cst_8 = arith.constant 0.000000e+00 : f32
    %9 = vector.broadcast %cst_8 : f32 to vector<64x32xf32>
    %10 = arith.maximumf %8, %9 : vector<64x32xf32>
    %11 = arith.truncf %10 : vector<64x32xf32> to vector<64x32xbf16>
    %c0_9 = arith.constant 0 : index
    %c0_10 = arith.constant 0 : index
    %12 = vector.load %arg4[%c0_9, %c0_10] : memref<32x128xbf16, #tpu.memory_space<vmem>>, vector<32x128xbf16>
    %cst_11 = arith.constant dense<0.000000e+00> : vector<64x32xf32>
    %13 = tpu.matmul %0, %11, %cst_11 {dimension_numbers = #tpu.dot_dimension_numbers<[1], [0], [0], [1], [0, 0, 1, 1], [], []>} : vector<64x64xbf16>, vector<64x32xbf16>, vector<64x32xf32> -> vector<64x32xf32>
    %14 = arith.truncf %13 : vector<64x32xf32> to vector<64x32xbf16>
    %cst_12 = arith.constant dense<0.000000e+00> : vector<64x128xf32>
    %15 = tpu.matmul %14, %12, %cst_12 {dimension_numbers = #tpu.dot_dimension_numbers<[1], [0], [0], [1], [0, 0, 1, 1], [], []>} : vector<64x32xbf16>, vector<32x128xbf16>, vector<64x128xf32> -> vector<64x128xf32>
    %c0_13 = arith.constant 0 : index
    %c0_14 = arith.constant 0 : index
    %16 = vector.load %arg5[%c0_13, %c0_14] : memref<1x128xf32, #tpu.memory_space<vmem>>, vector<1x128xf32>
    %17 = vector.broadcast %16 : vector<1x128xf32> to vector<64x128xf32>
    %18 = arith.addf %15, %17 : vector<64x128xf32>
    %cst_15 = arith.constant dense<0xFF800000> : vector<64xf32>
    %19 = vector.multi_reduction <maximumf>, %18, %cst_15 [1] : vector<64x128xf32> to vector<64xf32>
    %20 = vector.shape_cast %19 : vector<64xf32> to vector<64x1xf32>
    %21 = vector.broadcast %20 : vector<64x1xf32> to vector<64x128xf32>
    %22 = arith.subf %18, %21 : vector<64x128xf32>
    %23 = math.exp %22 : vector<64x128xf32>
    %cst_16 = arith.constant dense<0.000000e+00> : vector<64xf32>
    %24 = vector.multi_reduction <add>, %23, %cst_16 [1] : vector<64x128xf32> to vector<64xf32>
    %25 = vector.shape_cast %24 : vector<64xf32> to vector<64x1xf32>
    %26 = math.log %25 : vector<64x1xf32>
    %27 = vector.broadcast %26 : vector<64x1xf32> to vector<64x128xf32>
    %28 = arith.subf %22, %27 : vector<64x128xf32>
    %c0_17 = arith.constant 0 : index
    %c0_18 = arith.constant 0 : index
    %29 = vector.load %arg6[%c0_17, %c0_18] : memref<64x128xf32, #tpu.memory_space<vmem>>, vector<64x128xf32>
    tpu.vector_store %arg6[%c0_17, %c0_18], %28 {strides = array<i32>} : memref<64x128xf32, #tpu.memory_space<vmem>>, vector<64x128xf32>,
    return
  }
}

</mosaic_0001>

<llo_original>
// kernel: gcn_forward.1
$region0: #{gcn_forward.1}
  #allocation0 [shape = 'u32[]', space=smem, size = 0x4, offset = 0x4, fixed_abs, tag = 'smem constant byte address 0x4 - core index']
  #allocation1 [shape = 'u32[72,128]{1,0:T(1,128)}', space=vmem, size = 0x9000, scoped, tag = 'internal scratch']
  %s0 = inlined_call_operand.vmem [shape: bf16[64,16], index: 0, kind: input, shape index: {}]
  %s1 = inlined_call_operand.vmem [shape: bf16[64,64], index: 1, kind: input, shape index: {}]
  %s2 = inlined_call_operand.vmem [shape: bf16[16,32], index: 2, kind: input, shape index: {}]
  %s3 = inlined_call_operand.vmem [shape: f32[1,32], index: 3, kind: input, shape index: {}]
  %s4 = inlined_call_operand.vmem [shape: bf16[32,128], index: 4, kind: input, shape index: {}]
  %s5 = inlined_call_operand.vmem [shape: f32[1,128], index: 5, kind: input, shape index: {}]
  %s6 = inlined_call_operand.vmem [shape: f32[64,128], index: 6, kind: output, shape index: {}]
  %s7 = sld [smem:[#allocation0]]
  $region34: #{gcn_forward.1} parent=0
    _
  %s9 = ssub.s32 1, %s7
  %s10 = scalar_select 0, %s9, %s7
  // Predicated region
  $region2: #{gcn_forward.1} parent=0 // pred_check
    _
  $region3: #{gcn_forward.1} parent=0 // pred_check_branch
    %12 = sbr.rel (0) target = $region5
  $region4: #{gcn_forward.1} parent=0 // pred_region
    _
  $region5: #{gcn_forward.1} parent=0 // pred_fallthru
    _
  // Predicated region
  $region6: #{gcn_forward.1} parent=0 // pred_check
    _
  $region7: #{gcn_forward.1} parent=0 // pred_check_branch
    %14 = sbr.rel (0) target = $region9
  $region8: #{gcn_forward.1} parent=0 // pred_region
    _
  $region9: #{gcn_forward.1} parent=0 // pred_fallthru
    _
  // Predicated region
  $region10: #{gcn_forward.1} parent=0 // pred_check
    _
  $region11: #{gcn_forward.1} parent=0 // pred_check_branch
    %16 = sbr.rel (0) target = $region13
  $region12: #{gcn_forward.1} parent=0 // pred_region
    _
  $region13: #{gcn_forward.1} parent=0 // pred_fallthru
    _
  // Predicated region
  $region14: #{gcn_forward.1} parent=0 // pred_check
    _
  $region15: #{gcn_forward.1} parent=0 // pred_check_branch
    %18 = sbr.rel (0) target = $region17
  $region16: #{gcn_forward.1} parent=0 // pred_region
    _
  $region17: #{gcn_forward.1} parent=0 // pred_fallthru
    _
  // Predicated region
  $region18: #{gcn_forward.1} parent=0 // pred_check
    _
  $region19: #{gcn_forward.1} parent=0 // pred_check_branch
    %20 = sbr.rel (0) target = $region21
  $region20: #{gcn_forward.1} parent=0 // pred_region
    _
  $region21: #{gcn_forward.1} parent=0 // pred_fallthru
    _
  // Predicated region
  $region22: #{gcn_forward.1} parent=0 // pred_check
    _
  $region23: #{gcn_forward.1} parent=0 // pred_check_branch
    %22 = sbr.rel (0) target = $region25
  $region24: #{gcn_forward.1} parent=0 // pred_region
    _
  $region25: #{gcn_forward.1} parent=0 // pred_fallthru
    _
  %v24 = vld [vmem:[%s1] sm:$0xf]
  %v25 = vld [vmem:[%s1 + $0x4] sm:$0xf]
  %v26 = vld [vmem:[%s1 + $0x8] sm:$0xf]
  %v27 = vld [vmem:[%s1 + $0xc] sm:$0xf]
  %v28 = vld [vmem:[%s1 + $0x10] sm:$0xf]
  %v29 = vld [vmem:[%s1 + $0x14] sm:$0xf]
  %v30 = vld [vmem:[%s1 + $0x18] sm:$0xf]
  %v31 = vld [vmem:[%s1 + $0x1c] sm:$0xf]
  %v32 = vld [vmem:[%s0] sm:$0xf]
  %v33 = vld [vmem:[%s0 + $0x4] sm:$0xf]
  %v34 = vld [vmem:[%s0 + $0x8] sm:$0xf]
  %v35 = vld [vmem:[%s0 + $0xc] sm:$0xf]
  %v36 = vld [vmem:[%s0 + $0x10] sm:$0xf]
  %v37 = vld [vmem:[%s0 + $0x14] sm:$0xf]
  %v38 = vld [vmem:[%s0 + $0x18] sm:$0xf]
  %v39 = vld [vmem:[%s0 + $0x1c] sm:$0xf]
  %v40 = vld [vmem:[%s2] sm:$0xf]
  %v41 = vld [vmem:[%s2 + $0x4] sm:$0xf]
  %v50 = vunpack.c.l.b16 %v24
  %v51 = vunpack.c.l.b16 %v25
  %v52 = vunpack.c.l.b16 %v26
  %v53 = vunpack.c.l.b16 %v27
  %v54 = vunpack.c.l.b16 %v28
  %v55 = vunpack.c.l.b16 %v29
  %v56 = vunpack.c.l.b16 %v30
  %v57 = vunpack.c.l.b16 %v31
  %v58 = vpack.c.b16 %v51, %v50
  %v59 = vpack.c.b16 %v53, %v52
  %v60 = vpack.c.b16 %v55, %v54
  %v61 = vpack.c.b16 %v57, %v56
  %v70 = vunpack.c.l.b16 %v32
  %v71 = vunpack.c.l.b16 %v33
  %v72 = vunpack.c.l.b16 %v34
  %v73 = vunpack.c.l.b16 %v35
  %v74 = vunpack.c.l.b16 %v36
  %v75 = vunpack.c.l.b16 %v37
  %v76 = vunpack.c.l.b16 %v38
  %v77 = vunpack.c.l.b16 %v39
  %v78 = vpack.c.b16 %v71, %v70
  %v79 = vpack.c.b16 %v73, %v72
  %v80 = vpack.c.b16 %v75, %v74
  %v81 = vpack.c.b16 %v77, %v76
  %vm86 = vcmask 523264
  %v88 = vsel %vm86, %v58, 0
  %v91 = vsel %vm86, %v59, 0
  %v94 = vsel %vm86, %v60, 0
  %v97 = vsel %vm86, %v61, 0
  %99 = vmatpush.bf16.msra.mxu0 0
  %100 = vmatpush.bf16.msra.mxu0 0
  %101 = vmatpush.bf16.msra.mxu0 0
  %102 = vmatpush.bf16.msra.mxu0 0
  %103 = vmatpush.bf16.msra.mxu0 %v81
  %104 = vmatpush.bf16.msra.mxu0 %v80
  %105 = vmatpush.bf16.msra.mxu0 %v79
  %106 = vmatpush.bf16.msra.mxu0 %v78
  %107 = vmatmul.bf16.gmra.mxu0 %v88
  %v108 = vpop.f32.mrf.mxu0
  %v109 = vadd.f32 0.0, %v108
  %v110 = vpop.f32.mrf.mxu0
  %v111 = vadd.f32 0.0, %v110
  %112 = vmatmul.bf16.gmra.mxu0 %v91
  %v113 = vpop.f32.mrf.mxu0
  %v114 = vadd.f32 0.0, %v113
  %v115 = vpop.f32.mrf.mxu0
  %v116 = vadd.f32 0.0, %v115
  %117 = vmatmul.bf16.gmra.mxu0 %v94
  %v118 = vpop.f32.mrf.mxu0
  %v119 = vadd.f32 0.0, %v118
  %v120 = vpop.f32.mrf.mxu0
  %v121 = vadd.f32 0.0, %v120
  %122 = vmatmul.bf16.gmra.mxu0 %v97
  %v123 = vpop.f32.mrf.mxu0
  %v124 = vadd.f32 0.0, %v123
  %v125 = vpop.f32.mrf.mxu0
  %v126 = vadd.f32 0.0, %v125
  %127 = vdwg.mxu0
  %v128 = vpack.c.bf16 %v111, %v109
  %v129 = vpack.c.bf16 %v116, %v114
  %v130 = vpack.c.bf16 %v121, %v119
  %v131 = vpack.c.bf16 %v126, %v124
  %v132 = vld [vmem:[%s3] sm:$0x1]
  %v134 = vperm.slane %v132, 0
  %v138 = vunpack.c.l.b16 %v40
  %v139 = vunpack.c.l.b16 %v41
  %v140 = vpack.c.b16 %v139, %v138
  %vm142 = vcmask 130048
  %v144 = vsel %vm142, %v128, 0
  %v147 = vsel %vm142, %v129, 0
  %v150 = vsel %vm142, %v130, 0
  %v153 = vsel %vm142, %v131, 0
  %155 = vmatpush.bf16.msra.mxu0 0
  %156 = vmatpush.bf16.msra.mxu0 0
  %157 = vmatpush.bf16.msra.mxu0 0
  %158 = vmatpush.bf16.msra.mxu0 0
  %159 = vmatpush.bf16.msra.mxu0 0
  %160 = vmatpush.bf16.msra.mxu0 0
  %161 = vmatpush.bf16.msra.mxu0 0
  %162 = vmatpush.bf16.msra.mxu0 %v140
  %163 = vmatmul.bf16.gmra.mxu0 %v144
  %v164 = vpop.f32.mrf.mxu0
  %v165 = vadd.f32 %v134, %v164
  %v166 = vpop.f32.mrf.mxu0
  %v167 = vadd.f32 %v134, %v166
  %168 = vmatmul.bf16.gmra.mxu0 %v147
  %v169 = vpop.f32.mrf.mxu0
  %v170 = vadd.f32 %v134, %v169
  %v171 = vpop.f32.mrf.mxu0
  %v172 = vadd.f32 %v134, %v171
  %173 = vmatmul.bf16.gmra.mxu0 %v150
  %v174 = vpop.f32.mrf.mxu0
  %v175 = vadd.f32 %v134, %v174
  %v176 = vpop.f32.mrf.mxu0
  %v177 = vadd.f32 %v134, %v176
  %178 = vmatmul.bf16.gmra.mxu0 %v153
  %v179 = vpop.f32.mrf.mxu0
  %v180 = vadd.f32 %v134, %v179
  %v181 = vpop.f32.mrf.mxu0
  %v182 = vadd.f32 %v134, %v181
  %183 = vdwg.mxu0
  %v184 = vmax.f32 %v165, 0.0
  %v185 = vmax.f32 %v167, 0.0
  %v186 = vmax.f32 %v170, 0.0
  %v187 = vmax.f32 %v172, 0.0
  %v188 = vmax.f32 %v175, 0.0
  %v189 = vmax.f32 %v177, 0.0
  %v190 = vmax.f32 %v180, 0.0
  %v191 = vmax.f32 %v182, 0.0
  %v192 = vpack.c.bf16 %v185, %v184
  %v193 = vpack.c.bf16 %v187, %v186
  %v194 = vpack.c.bf16 %v189, %v188
  %v195 = vpack.c.bf16 %v191, %v190
  %v196 = vld [vmem:[%s4] sm:$0xf]
  %v197 = vld [vmem:[%s4 + $0x4] sm:$0xf]
  %v198 = vld [vmem:[%s4 + $0x8] sm:$0xf]
  %v199 = vld [vmem:[%s4 + $0xc] sm:$0xf]
  %200 = vmatpush.bf16.msra.mxu0 0
  %201 = vmatpush.bf16.msra.mxu0 0
  %202 = vmatpush.bf16.msra.mxu0 0
  %203 = vmatpush.bf16.msra.mxu0 0
  %204 = vmatpush.bf16.msra.mxu0 %v195
  %205 = vmatpush.bf16.msra.mxu0 %v194
  %206 = vmatpush.bf16.msra.mxu0 %v193
  %207 = vmatpush.bf16.msra.mxu0 %v192
  %208 = vmatmul.bf16.gmra.mxu0 %v88
  %v209 = vpop.f32.mrf.mxu0
  %v210 = vadd.f32 0.0, %v209
  %v211 = vpop.f32.mrf.mxu0
  %v212 = vadd.f32 0.0, %v211
  %213 = vmatmul.bf16.gmra.mxu0 %v91
  %v214 = vpop.f32.mrf.mxu0
  %v215 = vadd.f32 0.0, %v214
  %v216 = vpop.f32.mrf.mxu0
  %v217 = vadd.f32 0.0, %v216
  %218 = vmatmul.bf16.gmra.mxu0 %v94
  %v219 = vpop.f32.mrf.mxu0
  %v220 = vadd.f32 0.0, %v219
  %v221 = vpop.f32.mrf.mxu0
  %v222 = vadd.f32 0.0, %v221
  %223 = vmatmul.bf16.gmra.mxu0 %v97
  %v224 = vpop.f32.mrf.mxu0
  %v225 = vadd.f32 0.0, %v224
  %v226 = vpop.f32.mrf.mxu0
  %v227 = vadd.f32 0.0, %v226
  %228 = vdwg.mxu0
  %v229 = vpack.c.bf16 %v212, %v210
  %v230 = vpack.c.bf16 %v217, %v215
  %v231 = vpack.c.bf16 %v222, %v220
  %v232 = vpack.c.bf16 %v227, %v225
  %v233 = vld [vmem:[%s5] sm:$0x1]
  %v235 = vperm.slane %v233, 0
  %v241 = vunpack.c.l.b16 %v196
  %v242 = vunpack.c.l.b16 %v197
  %v243 = vunpack.c.l.b16 %v198
  %v244 = vunpack.c.l.b16 %v199
  %v245 = vpack.c.b16 %v242, %v241
  %v246 = vpack.c.b16 %v244, %v243
  %vm249 = vcmask 261120
  %v251 = vsel %vm249, %v229, 0
  %v254 = vsel %vm249, %v230, 0
  %v257 = vsel %vm249, %v231, 0
  %v260 = vsel %vm249, %v232, 0
  %262 = vmatpush.bf16.msra.mxu0 0
  %263 = vmatpush.bf16.msra.mxu0 0
  %264 = vmatpush.bf16.msra.mxu0 0
  %265 = vmatpush.bf16.msra.mxu0 0
  %266 = vmatpush.bf16.msra.mxu0 0
  %267 = vmatpush.bf16.msra.mxu0 0
  %268 = vmatpush.bf16.msra.mxu0 %v246
  %269 = vmatpush.bf16.msra.mxu0 %v245
  %270 = vmatmul.bf16.gmra.mxu0 %v251
  %v271 = vpop.f32.mrf.mxu0
  %v272 = vadd.f32 %v235, %v271
  %v273 = vpop.f32.mrf.mxu0
  %v274 = vadd.f32 %v235, %v273
  %275 = vmatmul.bf16.gmra.mxu0 %v254
  %v276 = vpop.f32.mrf.mxu0
  %v277 = vadd.f32 %v235, %v276
  %v278 = vpop.f32.mrf.mxu0
  %v279 = vadd.f32 %v235, %v278
  %280 = vmatmul.bf16.gmra.mxu0 %v257
  %v281 = vpop.f32.mrf.mxu0
  %v282 = vadd.f32 %v235, %v281
  %v283 = vpop.f32.mrf.mxu0
  %v284 = vadd.f32 %v235, %v283
  %285 = vmatmul.bf16.gmra.mxu0 %v260
  %v286 = vpop.f32.mrf.mxu0
  %v287 = vadd.f32 %v235, %v286
  %v288 = vpop.f32.mrf.mxu0
  %v289 = vadd.f32 %v235, %v288
  %290 = vdwg.mxu0
  %291 = vmax.xlane.f32.xlu0 %v272
  %v292 = vpop.xlane.xlu0 %291
  %293 = vmax.xlane.f32.xlu0 %v274
  %v294 = vpop.xlane.xlu0 %293
  %295 = vmax.xlane.f32.xlu0 %v277
  %v296 = vpop.xlane.xlu0 %295
  %297 = vmax.xlane.f32.xlu0 %v279
  %v298 = vpop.xlane.xlu0 %297
  %299 = vmax.xlane.f32.xlu0 %v282
  %v300 = vpop.xlane.xlu0 %299
  %301 = vmax.xlane.f32.xlu0 %v284
  %v302 = vpop.xlane.xlu0 %301
  %303 = vmax.xlane.f32.xlu0 %v287
  %v304 = vpop.xlane.xlu0 %303
  %305 = vmax.xlane.f32.xlu0 %v289
  %v306 = vpop.xlane.xlu0 %305
  %v307 = vsub.f32 %v272, %v292
  %v308 = vsub.f32 %v274, %v294
  %v309 = vsub.f32 %v277, %v296
  %v310 = vsub.f32 %v279, %v298
  %v311 = vsub.f32 %v282, %v300
  %v312 = vsub.f32 %v284, %v302
  %v313 = vsub.f32 %v287, %v304
  %v314 = vsub.f32 %v289, %v306
  %v315 = vmul.f32 %v307, 1.442695
  %v316 = vpow.pop %v315
  %v317 = vmul.f32 %v308, 1.442695
  %v318 = vpow.pop %v317
  %v319 = vmul.f32 %v309, 1.442695
  %v320 = vpow.pop %v319
  %v321 = vmul.f32 %v310, 1.442695
  %v322 = vpow.pop %v321
  %v323 = vmul.f32 %v311, 1.442695
  %v324 = vpow.pop %v323
  %v325 = vmul.f32 %v312, 1.442695
  %v326 = vpow.pop %v325
  %v327 = vmul.f32 %v313, 1.442695
  %v328 = vpow.pop %v327
  %v329 = vmul.f32 %v314, 1.442695
  %v330 = vpow.pop %v329
  %331 = vadd.xlane.f32.xlu0 %v316
  %v332 = vpop.xlane.xlu0 %331
  %333 = vadd.xlane.f32.xlu0 %v318
  %v334 = vpop.xlane.xlu0 %333
  %335 = vadd.xlane.f32.xlu0 %v320
  %v336 = vpop.xlane.xlu0 %335
  %337 = vadd.xlane.f32.xlu0 %v322
  %v338 = vpop.xlane.xlu0 %337
  %339 = vadd.xlane.f32.xlu0 %v324
  %v340 = vpop.xlane.xlu0 %339
  %341 = vadd.xlane.f32.xlu0 %v326
  %v342 = vpop.xlane.xlu0 %341
  %343 = vadd.xlane.f32.xlu0 %v328
  %v344 = vpop.xlane.xlu0 %343
  %345 = vadd.xlane.f32.xlu0 %v330
  %v346 = vpop.xlane.xlu0 %345
  %v347 = vlog2.pop %v332
  %v348 = vmul.f32 %v347, 0.6931472
  %v349 = vlog2.pop %v334
  %v350 = vmul.f32 %v349, 0.6931472
  %v351 = vlog2.pop %v336
  %v352 = vmul.f32 %v351, 0.6931472
  %v353 = vlog2.pop %v338
  %v354 = vmul.f32 %v353, 0.6931472
  %v355 = vlog2.pop %v340
  %v356 = vmul.f32 %v355, 0.6931472
  %v357 = vlog2.pop %v342
  %v358 = vmul.f32 %v357, 0.6931472
  %v359 = vlog2.pop %v344
  %v360 = vmul.f32 %v359, 0.6931472
  %v361 = vlog2.pop %v346
  %v362 = vmul.f32 %v361, 0.6931472
  %v363 = vsub.f32 %v307, %v348
  %v364 = vsub.f32 %v308, %v350
  %v365 = vsub.f32 %v309, %v352
  %v366 = vsub.f32 %v310, %v354
  %v367 = vsub.f32 %v311, %v356
  %v368 = vsub.f32 %v312, %v358
  %v369 = vsub.f32 %v313, %v360
  %v370 = vsub.f32 %v314, %v362
  %371 = vst [vmem:[%s6] sm:$0xff] %v363
  %372 = vst [vmem:[%s6 + $0x8] sm:$0xff] %v364
  %373 = vst [vmem:[%s6 + $0x10] sm:$0xff] %v365
  %374 = vst [vmem:[%s6 + $0x18] sm:$0xff] %v366
  %375 = vst [vmem:[%s6 + $0x20] sm:$0xff] %v367
  %376 = vst [vmem:[%s6 + $0x28] sm:$0xff] %v368
  %377 = vst [vmem:[%s6 + $0x30] sm:$0xff] %v369
  %378 = vst [vmem:[%s6 + $0x38] sm:$0xff] %v370
  // Predicated region
  $region26: #{gcn_forward.1} parent=0 // pred_check
    _
  $region27: #{gcn_forward.1} parent=0 // pred_check_branch
    %380 = sbr.rel (0) target = $region29
  $region28: #{gcn_forward.1} parent=0 // pred_region
    _
  $region29: #{gcn_forward.1} parent=0 // pred_fallthru
    _
  // Predicated region
  $region30: #{gcn_forward.1} parent=0 // pred_check
    _
  $region31: #{gcn_forward.1} parent=0 // pred_check_branch
    %382 = sbr.rel (0) target = $region33
  $region32: #{gcn_forward.1} parent=0 // pred_region
    _
  $region33: #{gcn_forward.1} parent=0 // pred_fallthru
    _

</llo_original>
